<compile_context>
chip_gen: v5e
topology: v5e:2x2
jax: 0.10.0
libtpu: 0.0.40
codegen_flags: <defaults>
</compile_context>

<pallas_src>
import functools

import jax
import jax.numpy as jnp
import numpy as np
from jax import lax
from jax.experimental import pallas as pl
from jax.experimental.pallas import tpu as pltpu

KSIZE = 3  # kernel_size=3, stride=1 (module defaults)


@functools.lru_cache(maxsize=None)
def _roll_matches_numpy() -> bool:
    """Pin down pltpu.roll's rotation direction on this backend (runs once).

    True  => roll(x, s)[i] == x[(i - s) % n]  (numpy convention)
    False => the opposite direction.
    The depthwise shifts below are built from this, so the kernel is correct
    under either convention.
    """
    def k(x_ref, o_ref):
        o_ref[...] = pltpu.roll(x_ref[...], 1, axis=1)

    x = jnp.tile(jnp.arange(128, dtype=jnp.float32)[None, :], (8, 1))
    y = pl.pallas_call(
        k, out_shape=jax.ShapeDtypeStruct((8, 128), jnp.float32))(x)
    return bool(np.asarray(y)[0, 0] == 127.0)


def _conv_block_kernel(x_ref, wdw_ref, b1_ref, wpw_ref, b2_ref, masks_ref,
                       out_ref, *, W, S, Cin, Cout, use_mxu, roll_is_numpy):
    # x_ref    : (Cin, S)      one batch element, spatial flattened (S = H*W)
    # wdw_ref  : (Cin, 9)      depthwise weights, BN1 scale pre-folded
    # b1_ref   : (Cin, 1)      BN1 bias
    # wpw_ref  : (Cout, Cin)   pointwise weights, BN2 scale pre-folded
    # b2_ref   : (Cout, 1)     BN2 bias
    # masks_ref: (4, S)        boundary masks: [row!=0, row!=H-1, col!=0, col!=W-1]
    # out_ref  : (Cout, S)
    x2 = x_ref[...].astype(jnp.float32)
    wdw = wdw_ref[...]

    row_top = masks_ref[0:1, :]   # dest row != 0       (needed for dy = -1)
    row_bot = masks_ref[1:2, :]   # dest row != H-1     (needed for dy = +1)
    col_l = masks_ref[2:3, :]     # dest col != 0       (needed for dx = -1)
    col_r = masks_ref[3:4, :]     # dest col != W-1     (needed for dx = +1)

    def shift(v, d):
        # Returns t with t[:, s] == v[:, (s + d) % S]  (lane-axis XLU rotate).
        amt = (-d) % S if roll_is_numpy else d % S
        return pltpu.roll(v, amt, axis=1)

    # ---- depthwise 3x3 conv: 8 lane rolls + masked FMA (no padding) ----
    # Column-shifted copies, pre-masked at the image's left/right borders.
    # These masks are column-periodic along the flattened axis, so they stay
    # valid after the whole-row (+/-W) shifts below.
    xl = shift(x2, -1) * col_l    # source at col-1; dest col 0 zeroed
    xc = x2
    xr = shift(x2, 1) * col_r     # source at col+1; dest col W-1 zeroed

    # Weight flat index t = 3*(dy+1) + (dx+1)  (PyTorch 3x3 kernel, row-major).
    mid = wdw[:, 3:4] * xl + wdw[:, 4:5] * xc + wdw[:, 5:6] * xr        # dy = 0
    top = (wdw[:, 0:1] * shift(xl, -W) + wdw[:, 1:2] * shift(xc, -W)
           + wdw[:, 2:3] * shift(xr, -W))                               # dy = -1
    bot = (wdw[:, 6:7] * shift(xl, W) + wdw[:, 7:8] * shift(xc, W)
           + wdw[:, 8:9] * shift(xr, W))                                # dy = +1
    acc = mid + top * row_top + bot * row_bot

    # ---- BN1 bias + ReLU (scale already folded into wdw) ----
    h = jnp.maximum(acc + b1_ref[...], 0.0)

    # ---- pointwise 1x1 conv ----
    if use_mxu:
        # (Cout, Cin) @ (Cin, S) on the MXU; result layout == output block.
        y = lax.dot_general(wpw_ref[...].astype(jnp.float32), h,
                            (((1,), (0,)), ((), ())),
                            preferred_element_type=jnp.float32)
    else:
        # Tiny Cin: Cin broadcast-FMA passes on the VPU (MXU would be <1% used).
        y = wpw_ref[:, 0:1] * h[0:1, :]
        for ci in range(1, Cin):
            y = y + wpw_ref[:, ci:ci + 1] * h[ci:ci + 1, :]

    # ---- BN2 bias + ReLU ----
    y = jnp.maximum(y + b2_ref[...], 0.0)
    out_ref[...] = y.astype(out_ref.dtype)


def conv_block_pallas(x_nchw, w_dw, bn1_scale, bn1_bias, w_pw, bn2_scale,
                      bn2_bias):
    """x_nchw: (N, Cin, H, W). Returns (N, Cout, H, W), matching PyTorch."""
    N, Cin, H, W = x_nchw.shape
    Cout = w_pw.shape[0]
    S = H * W

    # Contiguous reshape only -- no transpose, no padded copy, no dtype change.
    x_flat = x_nchw.reshape(N, Cin, S)

    # Fold BN scales into the conv weights (bias + ReLU stay in the kernel).
    wdw2 = (w_dw[:, 0, :, :].reshape(Cin, KSIZE * KSIZE)
            * bn1_scale[:, None]).astype(jnp.float32)          # (Cin, 9)
    wpw2 = (w_pw[:, :, 0, 0] * bn2_scale[:, None]).astype(jnp.float32)  # (Cout, Cin)
    b1 = bn1_bias.reshape(Cin, 1).astype(jnp.float32)
    b2 = bn2_bias.reshape(Cout, 1).astype(jnp.float32)

    # Boundary masks over the flattened spatial axis.
    s_idx = jnp.arange(S, dtype=jnp.int32)
    row = s_idx // W
    col = s_idx % W
    masks = jnp.stack([row != 0, row != H - 1, col != 0, col != W - 1]).astype(
        jnp.float32)                                            # (4, S)

    use_mxu = Cin >= 16          # tiny channel counts stay on the VPU
    roll_is_numpy = _roll_matches_numpy()

    kernel = functools.partial(_conv_block_kernel, W=W, S=S, Cin=Cin,
                               Cout=Cout, use_mxu=use_mxu,
                               roll_is_numpy=roll_is_numpy)

    out_flat = pl.pallas_call(
        kernel,
        out_shape=jax.ShapeDtypeStruct((N, Cout, S), x_nchw.dtype),
        grid_spec=pltpu.PrefetchScalarGridSpec(
            num_scalar_prefetch=0,
            grid=(N,),
            in_specs=[
                pl.BlockSpec((None, Cin, S), lambda n: (n, 0, 0)),
                pl.BlockSpec((Cin, KSIZE * KSIZE), lambda n: (0, 0)),
                pl.BlockSpec((Cin, 1), lambda n: (0, 0)),
                pl.BlockSpec((Cout, Cin), lambda n: (0, 0)),
                pl.BlockSpec((Cout, 1), lambda n: (0, 0)),
                pl.BlockSpec((4, S), lambda n: (0, 0)),
            ],
            out_specs=pl.BlockSpec((None, Cout, S), lambda n: (n, 0, 0)),
        ),
        compiler_params=pltpu.CompilerParams(
            dimension_semantics=("parallel",),
            vmem_limit_bytes=32 * 1024 * 1024),
    )(x_flat, wdw2, b1, wpw2, b2, masks)

    # Contiguous split of the last dim -- free.
    return out_flat.reshape(N, Cout, H, W)


def conv_block_reference(x_nchw, w_dw, bn1_scale, bn1_bias, w_pw, bn2_scale,
                         bn2_bias):
    """Pure-JAX reference (lax conv) for correctness checking."""
    Cin = x_nchw.shape[1]
    y = lax.conv_general_dilated(
        x_nchw, w_dw, window_strides=(1, 1), padding="SAME",
        feature_group_count=Cin,
        dimension_numbers=("NCHW", "OIHW", "NCHW"),
        precision=lax.Precision.HIGHEST)
    y = y * bn1_scale[None, :, None, None] + bn1_bias[None, :, None, None]
    y = jnp.maximum(y, 0.0)
    y = lax.conv_general_dilated(
        y, w_pw, window_strides=(1, 1), padding="VALID",
        dimension_numbers=("NCHW", "OIHW", "NCHW"),
        precision=lax.Precision.HIGHEST)
    y = y * bn2_scale[None, :, None, None] + bn2_bias[None, :, None, None]
    return jnp.maximum(y, 0.0)


def fold_bn(gamma, beta, running_mean, running_var, eps=1e-5):
    scale = gamma / jnp.sqrt(running_var + eps)
    bias = beta - running_mean * scale
    return scale, bias


if __name__ == "__main__":
    N, Cin, Cout, H, W = 2, 4, 8, 16, 16

    key = jax.random.PRNGKey(0)
    keys = jax.random.split(key, 12)

    x = jax.random.normal(keys[0], (N, Cin, H, W), jnp.float32)

    # Depthwise conv weight: (Cin, 1, k, k); pointwise: (Cout, Cin, 1, 1)
    w_dw = jax.random.normal(keys[1], (Cin, 1, KSIZE, KSIZE), jnp.float32) * 0.3
    w_pw = jax.random.normal(keys[2], (Cout, Cin, 1, 1), jnp.float32) * 0.3

    # BatchNorm2d parameters (eval-mode), deterministic but non-trivial.
    g1 = 1.0 + 0.1 * jax.random.normal(keys[3], (Cin,), jnp.float32)
    be1 = 0.1 * jax.random.normal(keys[4], (Cin,), jnp.float32)
    rm1 = 0.1 * jax.random.normal(keys[5], (Cin,), jnp.float32)
    rv1 = 1.0 + 0.1 * jax.random.uniform(keys[6], (Cin,), jnp.float32)

    g2 = 1.0 + 0.1 * jax.random.normal(keys[7], (Cout,), jnp.float32)
    be2 = 0.1 * jax.random.normal(keys[8], (Cout,), jnp.float32)
    rm2 = 0.1 * jax.random.normal(keys[9], (Cout,), jnp.float32)
    rv2 = 1.0 + 0.1 * jax.random.uniform(keys[10], (Cout,), jnp.float32)

    s1, b1 = fold_bn(g1, be1, rm1, rv1)
    s2, b2 = fold_bn(g2, be2, rm2, rv2)

    out = conv_block_pallas(x, w_dw, s1, b1, w_pw, s2, b2)
    out = jax.block_until_ready(out)

    ref = jax.block_until_ready(
        conv_block_reference(x, w_dw, s1, b1, w_pw, s2, b2))
    np.testing.assert_allclose(np.asarray(out), np.asarray(ref),
                               rtol=1e-4, atol=1e-5)

    print("KERNEL_OK")
</pallas_src>

<mosaic_0001>
module attributes {stable_mosaic.version = 11 : i64} {
  func.func @k(%arg0: memref<8x128xf32, #tpu.memory_space<vmem>>, %arg1: memref<8x128xf32, #tpu.memory_space<vmem>>) attributes {dimension_semantics = [], scalar_prefetch = 0 : i64, scratch_operands = 0 : i64, tpu.core_type = #tpu.core_type<tc>} {
    %c0 = arith.constant 0 : index
    %c0_0 = arith.constant 0 : index
    %0 = vector.load %arg0[%c0, %c0_0] : memref<8x128xf32, #tpu.memory_space<vmem>>, vector<8x128xf32>
    %c1_i32 = arith.constant 1 : i32
    %1 = tpu.dynamic_rotate %0 by %c1_i32 dim 1 : vector<8x128xf32>, i32 -> vector<8x128xf32>
    %c0_1 = arith.constant 0 : index
    %c0_2 = arith.constant 0 : index
    %2 = vector.load %arg1[%c0_1, %c0_2] : memref<8x128xf32, #tpu.memory_space<vmem>>, vector<8x128xf32>
    tpu.vector_store %arg1[%c0_1, %c0_2], %1 {strides = array<i32>} : memref<8x128xf32, #tpu.memory_space<vmem>>, vector<8x128xf32>,
    return
  }
}

</mosaic_0001>

<llo_original>
// kernel: tpu_custom_call.1
$region0: #{tpu_custom_call.1}
  #allocation0 [shape = 'u32[]', space=smem, size = 0x4, offset = 0x4, fixed_abs, tag = 'smem constant byte address 0x4 - core index']
  #allocation1 [shape = 'u32[72,128]{1,0:T(1,128)}', space=vmem, size = 0x9000, scoped, tag = 'internal scratch']
  %s0 = inlined_call_operand.hbm [shape: f32[8,128], index: 0, kind: input, shape index: {}]
  %s1 = inlined_call_operand.hbm [shape: f32[8,128], index: 1, kind: output, shape index: {}]
  %s2 = sld [smem:[#allocation0]]
  $region18: #{tpu_custom_call.1} parent=0
    _
  %s4 = ssub.s32 1, %s2
  %s5 = scalar_select 0, %s4, %s2
  $region1: #{tpu_custom_call.1} parent=0
    #allocation2 [shape = 'u8[4096]{0}', space=vmem, size = 0x1000, scoped, tag = 'input window, operand 0, single buffered']
    #allocation3 [shape = 's32[1]{0}', space=sflag, size = 0x4, scoped, tag = 'scoped memory for tpu_custom_call.1']
    #allocation4 [shape = 's32[1]{0}', space=sflag, size = 0x4, scoped, tag = 'scoped memory for tpu_custom_call.1']
    #allocation5 [shape = 'u8[4096]{0}', space=vmem, size = 0x1000, scoped, tag = 'output window, operand 0, single buffered']
    %6 = vsyncpa [#allocation3], 0
    %7 = vsyncpa [#allocation4], 0
    // Predicated region
    $region2: #{tpu_custom_call.1} parent=1 // pred_check
      _
    $region3: #{tpu_custom_call.1} parent=1 // pred_check_branch
      %9 = sbr.rel (0) target = $region5
    $region4: #{tpu_custom_call.1} parent=1 // pred_region
      %11 = vsyncadd [#allocation3], 0
      %s13 = sshll.u32 %s0, 4
      %s14 = int_to_ptr.hbm [resolvable:$true] %s13
      %s15 = sshll.u32 [#allocation2], 4
      %s16 = int_to_ptr.vmem [resolvable:$true] %s15
      %18 = dma.hbm_to_vmem [thread:$0]  %s14, 128, %s16, [#allocation3]
    $region5: #{tpu_custom_call.1} parent=1 // pred_fallthru
      _
    // Predicated region
    $region6: #{tpu_custom_call.1} parent=1 // pred_check
      _
    $region7: #{tpu_custom_call.1} parent=1 // pred_check_branch
      %20 = sbr.rel (0) target = $region9
    $region8: #{tpu_custom_call.1} parent=1 // pred_region
      %22 = dma.done [#allocation3], 128
    $region9: #{tpu_custom_call.1} parent=1 // pred_fallthru
      _
    %v23 = vld [vmem:[#allocation2] sm:$0xff]
    %24 = vrot.lane.b32.xlu0 %v23, 1
    %v25 = vpop.permute.xlu0 %24
    %26 = vst [vmem:[#allocation5] sm:$0xff] %v25
    // Predicated region
    $region10: #{tpu_custom_call.1} parent=1 // pred_check
      _
    $region11: #{tpu_custom_call.1} parent=1 // pred_check_branch
      %28 = sbr.rel (0) target = $region13
    $region12: #{tpu_custom_call.1} parent=1 // pred_region
      %30 = vsyncadd [#allocation4], 0
      %s32 = sshll.u32 [#allocation5], 4
      %s33 = int_to_ptr.vmem [resolvable:$true] %s32
      %s34 = sshll.u32 %s1, 4
      %s35 = int_to_ptr.hbm [resolvable:$true] %s34
      %37 = dma.vmem_to_hbm [thread:$0]  %s33, 128, %s35, [#allocation4]
    $region13: #{tpu_custom_call.1} parent=1 // pred_fallthru
      _
    // Predicated region
    $region14: #{tpu_custom_call.1} parent=1 // pred_check
      _
    $region15: #{tpu_custom_call.1} parent=1 // pred_check_branch
      %39 = sbr.rel (0) target = $region17
    $region16: #{tpu_custom_call.1} parent=1 // pred_region
      %41 = dma.done [#allocation4], 128
    $region17: #{tpu_custom_call.1} parent=1 // pred_fallthru
      _
    %42 = vsyncpa [#allocation3], 1
    %43 = vsyncpa [#allocation4], 1

</llo_original>
